<compile_context>
chip_gen: v7x
topology: tpu7x:2x2x1
jax: 0.10.0
libtpu: 0.0.40
codegen_flags: <defaults>
</compile_context>

<pallas_src>
import functools

import jax
import jax.numpy as jnp
from jax.experimental import pallas as pl
from jax.experimental.pallas import tpu as pltpu

EPS = 1e-4
_VMEM_LIMIT = 32 * 1024 * 1024        # safe scoped-VMEM ceiling on v5e / v6e / v7x
_TILE_BUDGET = 20 * 1024 * 1024       # budget for ~4 double-buffered tile streams
_FAST_PATH_BYTES = 4 * 1024 * 1024    # whole input resident in VMEM below this


def _is_multi_tensorcore_chip():
    """v7x has 2 TensorCores per chip; v5e/v6e have 1."""
    try:
        kind = jax.devices()[0].device_kind.lower()
    except Exception:
        return False
    return "v7" in kind or "tpu7" in kind


def _pick_channel_block(c, multi_tc):
    """Full C on single-TC chips (fewer grid steps, deeper tiles); >=2
    sublane-aligned blocks on v7x so the 'parallel' axis shards across TCs."""
    if multi_tc:
        for blk in (c // 2, 16, 8):
            if blk >= 8 and blk % 8 == 0 and c % blk == 0 and c // blk >= 2:
                return blk
    return c


def _pick_lane_tile(hw, c_blk):
    """Prefer the full HW as the lane tile whenever it fits the VMEM budget;
    otherwise the largest multiple of 128 dividing HW under the budget."""
    if hw % 128 != 0:
        # TODO(synk): pad/mask HW to a multiple of 128 for awkward feature maps;
        # a full-dim (exempt) lane block keeps correctness at reduced lane use.
        return hw
    cap = max(128, (_TILE_BUDGET // (16 * c_blk)) // 128 * 128)
    if hw <= cap:
        return hw
    best = 128
    t = 128
    while t <= cap:
        if hw % t == 0:
            best = t
        t += 128
    return best


# ---------- single-pass fast path: whole tensor resident in VMEM ----------
def _fused_bn_tanh_kernel(x_ref, o_ref):
    x = x_ref[...].astype(jnp.float32)                       # (N, C, HW)
    count = jnp.float32(x.shape[0] * x.shape[2])
    s = jnp.sum(jnp.sum(x, axis=2, keepdims=True), axis=0, keepdims=True)
    mean = s / count                                          # (1, C, 1)
    d = x - mean
    var = jnp.sum(jnp.sum(d * d, axis=2, keepdims=True), axis=0,
                  keepdims=True) / count                      # two-pass variance
    inv_std = jax.lax.rsqrt(var + EPS)
    o_ref[...] = jnp.tanh(d * inv_std).astype(o_ref.dtype)


# ---------- streamed phase 1: per-channel stats -> scale/shift ----------
def _stats_kernel(x_ref, scale_ref, shift_ref, sum_acc, sq_acc, *, count):
    n = pl.program_id(1)
    t = pl.program_id(2)

    @pl.when(jnp.logical_and(n == 0, t == 0))
    def _():
        sum_acc[...] = jnp.zeros_like(sum_acc)
        sq_acc[...] = jnp.zeros_like(sq_acc)

    x = x_ref[...].astype(jnp.float32)                        # (C_BLK, HW_TILE)
    sum_acc[...] += jnp.sum(x, axis=-1, keepdims=True)        # (C_BLK, 1)
    sq_acc[...] += jnp.sum(x * x, axis=-1, keepdims=True)

    # Fold stats to the fused-affine coefficients in-kernel (no XLA hop).
    @pl.when(jnp.logical_and(n == pl.num_programs(1) - 1,
                             t == pl.num_programs(2) - 1))
    def _():
        mean = sum_acc[...] / count
        var = jnp.maximum(sq_acc[...] / count - mean * mean, 0.0)  # biased var
        inv_std = jax.lax.rsqrt(var + EPS)
        scale_ref[...] = inv_std
        shift_ref[...] = -mean * inv_std


# ---------- streamed phase 2: normalize + tanh ----------
def _norm_tanh_kernel(x_ref, scale_ref, shift_ref, o_ref):
    x = x_ref[...].astype(jnp.float32)                        # (C_BLK, HW_TILE)
    y = jnp.tanh(x * scale_ref[...] + shift_ref[...])         # per-channel bcast
    o_ref[...] = y.astype(o_ref.dtype)


def model_tanh_forward(x, force_two_pass=False):
    """x: (N, C, H, W) float32 -> tanh(BatchNorm2d_train(x)), same shape/dtype."""
    N, C, H, W = x.shape
    HW = H * W
    elems = N * C * HW
    x3 = x.reshape(N, C, HW)          # free reshape (no transpose / HBM pass)

    # ---- fast path: one dispatch, 8 B/elem of HBM traffic ----
    if (not force_two_pass) and (x.dtype.itemsize * elems <= _FAST_PATH_BYTES):
        out3 = pl.pallas_call(
            _fused_bn_tanh_kernel,
            out_shape=jax.ShapeDtypeStruct((N, C, HW), x.dtype),
            in_specs=[pl.BlockSpec((N, C, HW), lambda: (0, 0, 0))],
            out_specs=pl.BlockSpec((N, C, HW), lambda: (0, 0, 0)),
            compiler_params=pltpu.CompilerParams(vmem_limit_bytes=_VMEM_LIMIT),
            cost_estimate=pl.CostEstimate(flops=7 * elems,
                                          transcendentals=2 * elems,
                                          bytes_accessed=8 * elems),
        )(x3)
        return out3.reshape(N, C, H, W)

    # ---- streamed two-pass path ----
    multi_tc = _is_multi_tensorcore_chip()
    c_blk = _pick_channel_block(C, multi_tc)
    hw_tile = _pick_lane_tile(HW, c_blk)
    grid = (C // c_blk, N, HW // hw_tile)

    x_spec = pl.BlockSpec((None, c_blk, hw_tile), lambda c, n, t: (n, c, t))
    ch_spec = pl.BlockSpec((c_blk, 1), lambda c, n, t: (c, 0))

    # Phase 1: streamed per-channel sum/sumsq, folded to scale/shift in-kernel.
    scale, shift = pl.pallas_call(
        functools.partial(_stats_kernel, count=float(N * HW)),
        out_shape=(jax.ShapeDtypeStruct((C, 1), jnp.float32),
                   jax.ShapeDtypeStruct((C, 1), jnp.float32)),
        grid_spec=pltpu.PrefetchScalarGridSpec(
            num_scalar_prefetch=0,
            grid=grid,
            in_specs=[x_spec],
            out_specs=(ch_spec, ch_spec),
            scratch_shapes=[pltpu.VMEM((c_blk, 1), jnp.float32),
                            pltpu.VMEM((c_blk, 1), jnp.float32)],
        ),
        compiler_params=pltpu.CompilerParams(
            dimension_semantics=("parallel", "arbitrary", "arbitrary"),
            vmem_limit_bytes=_VMEM_LIMIT),
        cost_estimate=pl.CostEstimate(flops=3 * elems, transcendentals=0,
                                      bytes_accessed=4 * elems + 8 * C),
    )(x3)

    # Phase 2: normalize + tanh, lane-dense output tiles, fully parallel grid.
    # NOTE: add input_output_aliases={0: 0} here if the caller donates x to
    # drop one N*C*HW*4-byte HBM allocation (requires buffer donation).
    out3 = pl.pallas_call(
        _norm_tanh_kernel,
        out_shape=jax.ShapeDtypeStruct((N, C, HW), x.dtype),
        grid_spec=pltpu.PrefetchScalarGridSpec(
            num_scalar_prefetch=0,
            grid=grid,
            in_specs=[x_spec, ch_spec, ch_spec],
            out_specs=x_spec,
        ),
        compiler_params=pltpu.CompilerParams(
            dimension_semantics=("parallel", "parallel", "parallel"),
            vmem_limit_bytes=_VMEM_LIMIT),
        cost_estimate=pl.CostEstimate(flops=2 * elems, transcendentals=elems,
                                      bytes_accessed=8 * elems + 8 * C),
    )(x3, scale, shift)

    return out3.reshape(N, C, H, W)


if __name__ == "__main__":
    key = jax.random.PRNGKey(0)
    # Small shape consistent with the module: BatchNorm2d(32) requires C=32.
    x = jax.random.normal(key, (2, 32, 16, 16), dtype=jnp.float32)

    # Reference: training-mode BN (biased var, eps=1e-4, no affine) + tanh.
    mean = jnp.mean(x, axis=(0, 2, 3), keepdims=True)
    var = jnp.mean((x - mean) ** 2, axis=(0, 2, 3), keepdims=True)
    ref = jnp.tanh((x - mean) / jnp.sqrt(var + EPS))

    fwd = jax.jit(model_tanh_forward, static_argnames="force_two_pass")

    out_fast = jax.block_until_ready(fwd(x))                          # VMEM-resident path
    out_stream = jax.block_until_ready(fwd(x, force_two_pass=True))   # streamed 2-pass path

    assert out_fast.shape == x.shape and out_fast.dtype == x.dtype
    assert out_stream.shape == x.shape and out_stream.dtype == x.dtype
    assert jnp.max(jnp.abs(out_fast - ref)) < 5e-5
    assert jnp.max(jnp.abs(out_stream - ref)) < 5e-5

    print("KERNEL_OK")
</pallas_src>

<mosaic_0001>
module attributes {stable_mosaic.version = 11 : i64} {
  func.func @_fused_bn_tanh_kernel(%arg0: memref<2x32x256xf32, #tpu.memory_space<vmem>>, %arg1: memref<2x32x256xf32, #tpu.memory_space<vmem>>) attributes {dimension_semantics = [], scalar_prefetch = 0 : i64, scratch_operands = 0 : i64, tpu.core_type = #tpu.core_type<tc>} {
    %c0 = arith.constant 0 : index
    %c0_0 = arith.constant 0 : index
    %c0_1 = arith.constant 0 : index
    %0 = vector.load %arg0[%c0, %c0_0, %c0_1] : memref<2x32x256xf32, #tpu.memory_space<vmem>>, vector<2x32x256xf32>
    %cst = arith.constant dense<0.000000e+00> : vector<2x32xf32>
    %1 = vector.multi_reduction <add>, %0, %cst [2] : vector<2x32x256xf32> to vector<2x32xf32>
    %2 = vector.shape_cast %1 : vector<2x32xf32> to vector<2x32x1xf32>
    %cst_2 = arith.constant dense<0.000000e+00> : vector<32x1xf32>
    %3 = vector.multi_reduction <add>, %2, %cst_2 [0] : vector<2x32x1xf32> to vector<32x1xf32>
    %4 = vector.shape_cast %3 : vector<32x1xf32> to vector<1x32x1xf32>
    %cst_3 = arith.constant 5.120000e+02 : f32
    %5 = vector.broadcast %cst_3 : f32 to vector<1x32x1xf32>
    %6 = arith.divf %4, %5 : vector<1x32x1xf32>
    %7 = vector.broadcast %6 : vector<1x32x1xf32> to vector<2x32x256xf32>
    %8 = arith.subf %0, %7 : vector<2x32x256xf32>
    %9 = arith.mulf %8, %8 : vector<2x32x256xf32>
    %cst_4 = arith.constant dense<0.000000e+00> : vector<2x32xf32>
    %10 = vector.multi_reduction <add>, %9, %cst_4 [2] : vector<2x32x256xf32> to vector<2x32xf32>
    %11 = vector.shape_cast %10 : vector<2x32xf32> to vector<2x32x1xf32>
    %cst_5 = arith.constant dense<0.000000e+00> : vector<32x1xf32>
    %12 = vector.multi_reduction <add>, %11, %cst_5 [0] : vector<2x32x1xf32> to vector<32x1xf32>
    %13 = vector.shape_cast %12 : vector<32x1xf32> to vector<1x32x1xf32>
    %cst_6 = arith.constant 5.120000e+02 : f32
    %14 = vector.broadcast %cst_6 : f32 to vector<1x32x1xf32>
    %15 = arith.divf %13, %14 : vector<1x32x1xf32>
    %cst_7 = arith.constant 9.99999974E-5 : f32
    %16 = vector.broadcast %cst_7 : f32 to vector<1x32x1xf32>
    %17 = arith.addf %15, %16 : vector<1x32x1xf32>
    %18 = math.rsqrt %17 : vector<1x32x1xf32>
    %19 = vector.broadcast %18 : vector<1x32x1xf32> to vector<2x32x256xf32>
    %20 = arith.mulf %8, %19 : vector<2x32x256xf32>
    %21 = math.tanh %20 : vector<2x32x256xf32>
    %c0_8 = arith.constant 0 : index
    %c0_9 = arith.constant 0 : index
    %c0_10 = arith.constant 0 : index
    %22 = vector.load %arg1[%c0_8, %c0_9, %c0_10] : memref<2x32x256xf32, #tpu.memory_space<vmem>>, vector<2x32x256xf32>
    tpu.vector_store %arg1[%c0_8, %c0_9, %c0_10], %21 {strides = array<i32>} : memref<2x32x256xf32, #tpu.memory_space<vmem>>, vector<2x32x256xf32>,
    return
  }
}

</mosaic_0001>

<llo_original>
// kernel: model_tanh_forward.1
$region0: #{model_tanh_forward.1}
  #allocation0 [shape = 'u32[]', space=smem, size = 0x4, offset = 0x4, fixed_abs, tag = 'smem constant byte address 0x4 - core index']
  #allocation1 [shape = 'u32[144,128]{1,0:T(1,128)}', space=vmem, size = 0x12000, scoped, tag = 'internal scratch']
  %s0 = inlined_call_operand.vmem [shape: f32[2,32,256], index: 0, kind: input, shape index: {}]
  %s1 = inlined_call_operand.vmem [shape: f32[2,32,256], index: 1, kind: output, shape index: {}]
  %s2 = sld [smem:[#allocation0]]
  $region14: #{model_tanh_forward.1} parent=0
    _
  %s4 = ssub.s32 1, %s2
  %s5 = scalar_select 0, %s4, %s2
  // Predicated region
  $region2: #{model_tanh_forward.1} parent=0 // pred_check
    _
  $region3: #{model_tanh_forward.1} parent=0 // pred_check_branch
    %7 = sbr.rel (0) target = $region5
  $region4: #{model_tanh_forward.1} parent=0 // pred_region
    _
  $region5: #{model_tanh_forward.1} parent=0 // pred_fallthru
    _
  %v8 = vld [vmem:[%s0] sm:$0xff]
  %v9 = vld [vmem:[%s0 + $0x8] sm:$0xff]
  %v10 = vld [vmem:[%s0 + $0x10] sm:$0xff]
  %v11 = vld [vmem:[%s0 + $0x18] sm:$0xff]
  %v12 = vld [vmem:[%s0 + $0x20] sm:$0xff]
  %v13 = vld [vmem:[%s0 + $0x28] sm:$0xff]
  %v14 = vld [vmem:[%s0 + $0x30] sm:$0xff]
  %v15 = vld [vmem:[%s0 + $0x38] sm:$0xff]
  %v16 = vld [vmem:[%s0 + $0x40] sm:$0xff]
  %v17 = vld [vmem:[%s0 + $0x48] sm:$0xff]
  %v18 = vld [vmem:[%s0 + $0x50] sm:$0xff]
  %v19 = vld [vmem:[%s0 + $0x58] sm:$0xff]
  %v20 = vld [vmem:[%s0 + $0x60] sm:$0xff]
  %v21 = vld [vmem:[%s0 + $0x68] sm:$0xff]
  %v22 = vld [vmem:[%s0 + $0x70] sm:$0xff]
  %v23 = vld [vmem:[%s0 + $0x78] sm:$0xff]
  %v24 = vadd.f32 %v8, %v9
  %25 = vadd.xlane.f32.xlu0 %v24
  %v26 = vpop.xlane.xlu0 %25
  %v27 = vadd.f32 %v10, %v11
  %28 = vadd.xlane.f32.xlu0 %v27
  %v29 = vpop.xlane.xlu0 %28
  %v30 = vadd.f32 %v12, %v13
  %31 = vadd.xlane.f32.xlu0 %v30
  %v32 = vpop.xlane.xlu0 %31
  %v33 = vadd.f32 %v14, %v15
  %34 = vadd.xlane.f32.xlu0 %v33
  %v35 = vpop.xlane.xlu0 %34
  %v36 = vadd.f32 %v16, %v17
  %37 = vadd.xlane.f32.xlu0 %v36
  %v38 = vpop.xlane.xlu0 %37
  %v39 = vadd.f32 %v18, %v19
  %40 = vadd.xlane.f32.xlu0 %v39
  %v41 = vpop.xlane.xlu0 %40
  %v42 = vadd.f32 %v20, %v21
  %43 = vadd.xlane.f32.xlu0 %v42
  %v44 = vpop.xlane.xlu0 %43
  %v45 = vadd.f32 %v22, %v23
  %46 = vadd.xlane.f32.xlu0 %v45
  %v47 = vpop.xlane.xlu0 %46
  %v48 = vadd.f32 %v26, %v38
  %v49 = vadd.f32 %v29, %v41
  %v50 = vadd.f32 %v32, %v44
  %v51 = vadd.f32 %v35, %v47
  %v52 = vrcp.pop 512.0
  %v53 = vmul.f32 %v48, %v52
  %v54 = vmul.f32 %v49, %v52
  %v55 = vmul.f32 %v50, %v52
  %v56 = vmul.f32 %v51, %v52
  %v57 = vsub.f32 %v8, %v53
  %v58 = vsub.f32 %v9, %v53
  %v59 = vsub.f32 %v10, %v54
  %v60 = vsub.f32 %v11, %v54
  %v61 = vsub.f32 %v12, %v55
  %v62 = vsub.f32 %v13, %v55
  %v63 = vsub.f32 %v14, %v56
  %v64 = vsub.f32 %v15, %v56
  %v65 = vsub.f32 %v16, %v53
  %v66 = vsub.f32 %v17, %v53
  %v67 = vsub.f32 %v18, %v54
  %v68 = vsub.f32 %v19, %v54
  %v69 = vsub.f32 %v20, %v55
  %v70 = vsub.f32 %v21, %v55
  %v71 = vsub.f32 %v22, %v56
  %v72 = vsub.f32 %v23, %v56
  %v73 = vmul.f32 %v57, %v57
  %v74 = vmul.f32 %v58, %v58
  %v75 = vmul.f32 %v59, %v59
  %v76 = vmul.f32 %v60, %v60
  %v77 = vmul.f32 %v61, %v61
  %v78 = vmul.f32 %v62, %v62
  %v79 = vmul.f32 %v63, %v63
  %v80 = vmul.f32 %v64, %v64
  %v81 = vmul.f32 %v65, %v65
  %v82 = vmul.f32 %v66, %v66
  %v83 = vmul.f32 %v67, %v67
  %v84 = vmul.f32 %v68, %v68
  %v85 = vmul.f32 %v69, %v69
  %v86 = vmul.f32 %v70, %v70
  %v87 = vmul.f32 %v71, %v71
  %v88 = vmul.f32 %v72, %v72
  %v89 = vadd.f32 %v73, %v74
  %90 = vadd.xlane.f32.xlu0 %v89
  %v91 = vpop.xlane.xlu0 %90
  %v92 = vadd.f32 %v75, %v76
  %93 = vadd.xlane.f32.xlu0 %v92
  %v94 = vpop.xlane.xlu0 %93
  %v95 = vadd.f32 %v77, %v78
  %96 = vadd.xlane.f32.xlu0 %v95
  %v97 = vpop.xlane.xlu0 %96
  %v98 = vadd.f32 %v79, %v80
  %99 = vadd.xlane.f32.xlu0 %v98
  %v100 = vpop.xlane.xlu0 %99
  %v101 = vadd.f32 %v81, %v82
  %102 = vadd.xlane.f32.xlu0 %v101
  %v103 = vpop.xlane.xlu0 %102
  %v104 = vadd.f32 %v83, %v84
  %105 = vadd.xlane.f32.xlu0 %v104
  %v106 = vpop.xlane.xlu0 %105
  %v107 = vadd.f32 %v85, %v86
  %108 = vadd.xlane.f32.xlu0 %v107
  %v109 = vpop.xlane.xlu0 %108
  %v110 = vadd.f32 %v87, %v88
  %111 = vadd.xlane.f32.xlu0 %v110
  %v112 = vpop.xlane.xlu0 %111
  %v113 = vadd.f32 %v91, %v103
  %v114 = vadd.f32 %v94, %v106
  %v115 = vadd.f32 %v97, %v109
  %v116 = vadd.f32 %v100, %v112
  %v117 = vmul.f32 %v113, %v52
  %v118 = vmul.f32 %v114, %v52
  %v119 = vmul.f32 %v115, %v52
  %v120 = vmul.f32 %v116, %v52
  %v121 = vadd.f32 %v117, 0.0001
  %v122 = vadd.f32 %v118, 0.0001
  %v123 = vadd.f32 %v119, 0.0001
  %v124 = vadd.f32 %v120, 0.0001
  %v125 = vrsqrt.pop %v121
  %v126 = vrsqrt.pop %v122
  %v127 = vrsqrt.pop %v123
  %v128 = vrsqrt.pop %v124
  %v129 = vmul.f32 %v57, %v125
  %v130 = vmul.f32 %v58, %v125
  %v131 = vmul.f32 %v59, %v126
  %v132 = vmul.f32 %v60, %v126
  %v133 = vmul.f32 %v61, %v127
  %v134 = vmul.f32 %v62, %v127
  %v135 = vmul.f32 %v63, %v128
  %v136 = vmul.f32 %v64, %v128
  %v137 = vmul.f32 %v65, %v125
  %v138 = vmul.f32 %v66, %v125
  %v139 = vmul.f32 %v67, %v126
  %v140 = vmul.f32 %v68, %v126
  %v141 = vmul.f32 %v69, %v127
  %v142 = vmul.f32 %v70, %v127
  %v143 = vmul.f32 %v71, %v128
  %v144 = vmul.f32 %v72, %v128
  %v145 = vtanh.pop %v129
  %v146 = vtanh.pop %v130
  %v147 = vtanh.pop %v131
  %v148 = vtanh.pop %v132
  %v149 = vtanh.pop %v133
  %v150 = vtanh.pop %v134
  %v151 = vtanh.pop %v135
  %v152 = vtanh.pop %v136
  %v153 = vtanh.pop %v137
  %v154 = vtanh.pop %v138
  %v155 = vtanh.pop %v139
  %v156 = vtanh.pop %v140
  %v157 = vtanh.pop %v141
  %v158 = vtanh.pop %v142
  %v159 = vtanh.pop %v143
  %v160 = vtanh.pop %v144
  %161 = vst [vmem:[%s1] sm:$0xff] %v145
  %162 = vst [vmem:[%s1 + $0x8] sm:$0xff] %v146
  %163 = vst [vmem:[%s1 + $0x10] sm:$0xff] %v147
  %164 = vst [vmem:[%s1 + $0x18] sm:$0xff] %v148
  %165 = vst [vmem:[%s1 + $0x20] sm:$0xff] %v149
  %166 = vst [vmem:[%s1 + $0x28] sm:$0xff] %v150
  %167 = vst [vmem:[%s1 + $0x30] sm:$0xff] %v151
  %168 = vst [vmem:[%s1 + $0x38] sm:$0xff] %v152
  %169 = vst [vmem:[%s1 + $0x40] sm:$0xff] %v153
  %170 = vst [vmem:[%s1 + $0x48] sm:$0xff] %v154
  %171 = vst [vmem:[%s1 + $0x50] sm:$0xff] %v155
  %172 = vst [vmem:[%s1 + $0x58] sm:$0xff] %v156
  %173 = vst [vmem:[%s1 + $0x60] sm:$0xff] %v157
  %174 = vst [vmem:[%s1 + $0x68] sm:$0xff] %v158
  %175 = vst [vmem:[%s1 + $0x70] sm:$0xff] %v159
  %176 = vst [vmem:[%s1 + $0x78] sm:$0xff] %v160
  // Predicated region
  $region6: #{model_tanh_forward.1} parent=0 // pred_check
    _
  $region7: #{model_tanh_forward.1} parent=0 // pred_check_branch
    %178 = sbr.rel (0) target = $region9
  $region8: #{model_tanh_forward.1} parent=0 // pred_region
    _
  $region9: #{model_tanh_forward.1} parent=0 // pred_fallthru
    _
  // Predicated region
  $region10: #{model_tanh_forward.1} parent=0 // pred_check
    _
  $region11: #{model_tanh_forward.1} parent=0 // pred_check_branch
    %180 = sbr.rel (0) target = $region13
  $region12: #{model_tanh_forward.1} parent=0 // pred_region
    _
  $region13: #{model_tanh_forward.1} parent=0 // pred_fallthru
    _

</llo_original>
